<compile_context>
chip_gen: v7x
topology: tpu7x:2x2x1
jax: 0.10.0
libtpu: 0.0.40
codegen_flags: <defaults>
</compile_context>

<pallas_src>
import functools
import math

import jax
import jax.numpy as jnp
from jax.experimental import pallas as pl
from jax.experimental.pallas import tpu as pltpu

_H1 = 256          # first hidden width
_H2 = 64           # second hidden width (logical)
_H2_PAD = 128      # second hidden width padded to a full lane group
_SUBLANE = 16      # batch-row granularity (multiple of 16 keeps bf16 tiles aligned)


def _round_up(a, m):
    return (a + m - 1) // m * m


def _choose_tile(n, block_b):
    """Pick the batch tile: as large as block_b, but never one huge grid step."""
    block_b = max(_SUBLANE, _round_up(block_b, _SUBLANE))
    n_r = _round_up(n, _SUBLANE)
    steps = max(1, -(-n_r // block_b))
    # If the whole batch would be a single grid step, split large batches so
    # both of v7x's TensorCores get work on the "parallel" grid axis.
    if steps == 1 and n_r >= 512:
        steps = 2
    return _round_up(-(-n_r // steps), _SUBLANE)


def _mlp_kernel(x_ref, w1_ref, b1_ref, w2_ref, b2_ref, w3_ref, b3_ref, o_ref):
    # Layer 0: cast the x tile to bf16 in VMEM (no extra HBM pass), bf16 MXU
    # matmul with f32 accumulation, then bias + LeakyReLU on the VPU in f32.
    x_bf = x_ref[...].astype(jnp.bfloat16)
    h1 = jnp.dot(x_bf, w1_ref[...], preferred_element_type=jnp.float32)
    h1 = h1 + b1_ref[...]
    h1 = jnp.where(h1 > 0, h1, 0.2 * h1)

    # Layer 2: (TB, 256) @ (256, 128) f32 (hidden dim zero-padded 64 -> 128).
    h2 = jnp.dot(h1, w2_ref[...], preferred_element_type=jnp.float32) + b2_ref[...]
    h2 = jnp.where(h2 > 0, h2, 0.2 * h2)

    # Layer 4: out_features == 1.  Contract the padded 128-lane hidden dim of
    # h2 against the single w3 row -> (1, TB): lane-dense output, no masked
    # stores, no cross-lane relayout.  Padded columns of w3 are zero.
    logits = jax.lax.dot_general(
        w3_ref[...], h2,
        dimension_numbers=(((1,), (1,)), ((), ())),
        preferred_element_type=jnp.float32)                     # (1, TB)
    out = jax.nn.sigmoid(logits + b3_ref[0])
    o_ref[...] = out.reshape(o_ref.shape)                       # (1, 1, TB)


@functools.partial(jax.jit, static_argnames=("block_b",))
def discriminator_forward(x, w1, b1, w2, b2, w3, b3, *, block_b=512):
    """x: (N, C, H, W).  Weights stored as (in_features, out_features).

    Returns (N, 1) float32 probabilities, matching the PyTorch module.
    """
    n = x.shape[0]
    d_in = math.prod(x.shape[1:])
    x_flat = x.reshape(n, d_in).astype(jnp.float32)   # == torch x.view(N, -1)

    w1_bf = w1.astype(jnp.bfloat16)
    b1_r = b1.reshape(1, _H1).astype(jnp.float32)

    # Zero-pad the 64-wide hidden layer to 128 lanes.
    w2_p = jnp.zeros((_H1, _H2_PAD), jnp.float32).at[:, :_H2].set(
        w2.astype(jnp.float32))
    b2_p = jnp.zeros((1, _H2_PAD), jnp.float32).at[:, :_H2].set(
        b2.reshape(1, _H2).astype(jnp.float32))
    w3_r = jnp.zeros((1, _H2_PAD), jnp.float32).at[:, :_H2].set(
        w3.reshape(1, _H2).astype(jnp.float32))
    b3_s = b3.reshape((1,)).astype(jnp.float32)        # scalar bias -> SMEM

    tile = _choose_tile(n, block_b)
    n_pad = _round_up(n, tile)
    if n_pad != n:   # pad the batch only when needed
        x_flat = jnp.pad(x_flat, ((0, n_pad - n), (0, 0)))
    n_blocks = n_pad // tile

    out_rows = pl.pallas_call(
        _mlp_kernel,
        out_shape=jax.ShapeDtypeStruct((n_blocks, 1, tile), jnp.float32),
        grid=(n_blocks,),
        in_specs=[
            pl.BlockSpec((tile, d_in), lambda i: (i, 0)),        # x tile (f32)
            pl.BlockSpec((d_in, _H1), lambda i: (0, 0)),         # W1 (bf16)
            pl.BlockSpec((1, _H1), lambda i: (0, 0)),            # b1
            pl.BlockSpec((_H1, _H2_PAD), lambda i: (0, 0)),      # W2 (padded)
            pl.BlockSpec((1, _H2_PAD), lambda i: (0, 0)),        # b2 (padded)
            pl.BlockSpec((1, _H2_PAD), lambda i: (0, 0)),        # w3 row (padded)
            pl.BlockSpec(memory_space=pltpu.MemorySpace.SMEM),   # b3 scalar
        ],
        out_specs=pl.BlockSpec((1, 1, tile), lambda i: (i, 0, 0)),
        compiler_params=pltpu.CompilerParams(
            dimension_semantics=("parallel",),
            vmem_limit_bytes=32 * 1024 * 1024,
        ),
    )(x_flat, w1_bf, b1_r, w2_p, b2_p, w3_r, b3_s)

    return out_rows.reshape(n_pad, 1)[:n]


def init_params(key, d_in):
    """nn.Linear-style U(-1/sqrt(fan_in), 1/sqrt(fan_in)) init.

    Weights are stored as (in_features, out_features) (transpose of PyTorch's
    layout) so the kernel computes y = x @ W + b.
    """
    dims = [(d_in, _H1), (_H1, _H2), (_H2, 1)]
    params = []
    for i, (fin, fout) in enumerate(dims):
        kw, kb = jax.random.split(jax.random.fold_in(key, i))
        bound = 1.0 / math.sqrt(float(fin))
        w = jax.random.uniform(kw, (fin, fout), jnp.float32, -bound, bound)
        b = jax.random.uniform(kb, (fout,), jnp.float32, -bound, bound)
        params += [w, b]
    return params


def _reference(x, w1, b1, w2, b2, w3, b3, *, match_kernel_precision=True):
    """Pure-JAX reference.  With match_kernel_precision=True the first matmul
    uses the same bf16 inputs / f32 accumulation as the kernel."""
    xf = x.reshape(x.shape[0], -1).astype(jnp.float32)
    if match_kernel_precision:
        xf = xf.astype(jnp.bfloat16)
        w1 = w1.astype(jnp.bfloat16)
    h = jnp.dot(xf, w1, preferred_element_type=jnp.float32) + b1.reshape(1, -1)
    h = jnp.where(h > 0, h, 0.2 * h)
    h = jnp.dot(h, w2, preferred_element_type=jnp.float32) + b2.reshape(1, -1)
    h = jnp.where(h > 0, h, 0.2 * h)
    h = jnp.dot(h, w3, preferred_element_type=jnp.float32) + b3.reshape(1, -1)
    return jax.nn.sigmoid(h)


if __name__ == "__main__":
    # image_size = (3, 16, 16) -> in_features = 768
    C, H, W = 3, 16, 16
    key = jax.random.PRNGKey(0)
    kx, kp, kx2 = jax.random.split(key, 3)
    params = init_params(kp, C * H * W)

    # Small case (matches the module's expected usage): batch = 2.
    x_small = jax.random.normal(kx, (2, C, H, W), jnp.float32)
    out_small = jax.block_until_ready(discriminator_forward(x_small, *params))
    assert out_small.shape == (2, 1)
    ref_match = _reference(x_small, *params, match_kernel_precision=True)
    ref_f32 = _reference(x_small, *params, match_kernel_precision=False)
    assert jnp.allclose(out_small, ref_match, atol=1e-3), float(
        jnp.max(jnp.abs(out_small - ref_match)))
    assert jnp.allclose(out_small, ref_f32, atol=2e-2), float(
        jnp.max(jnp.abs(out_small - ref_f32)))

    # Larger batch exercising a multi-step grid + batch-padding path.
    x_big = jax.random.normal(kx2, (272, C, H, W), jnp.float32)
    out_big = jax.block_until_ready(
        discriminator_forward(x_big, *params, block_b=128))
    ref_big = _reference(x_big, *params, match_kernel_precision=True)
    assert out_big.shape == (272, 1)
    assert jnp.allclose(out_big, ref_big, atol=1e-3), float(
        jnp.max(jnp.abs(out_big - ref_big)))

    print("KERNEL_OK")
</pallas_src>

<mosaic_0001>
module attributes {stable_mosaic.version = 11 : i64} {
  func.func @_mlp_kernel(%arg0: i32, %arg1: memref<16x768xf32, #tpu.memory_space<vmem>>, %arg2: memref<768x256xbf16, #tpu.memory_space<vmem>>, %arg3: memref<1x256xf32, #tpu.memory_space<vmem>>, %arg4: memref<256x128xf32, #tpu.memory_space<vmem>>, %arg5: memref<1x128xf32, #tpu.memory_space<vmem>>, %arg6: memref<1x128xf32, #tpu.memory_space<vmem>>, %arg7: memref<1xf32, #tpu.memory_space<smem>>, %arg8: memref<1x1x16xf32, #tpu.memory_space<vmem>>) attributes {dimension_semantics = [#tpu.dimension_semantics<parallel>], iteration_bounds = array<i64: 1>, scalar_prefetch = 0 : i64, scratch_operands = 0 : i64, tpu.core_type = #tpu.core_type<tc>, window_params = [{transform_indices = @transform_0, window_bounds = array<i64: 16, 768>}, {pipeline_mode = #tpu.pipeline_mode<synchronous>, transform_indices = @transform_1, window_bounds = array<i64: 768, 256>}, {pipeline_mode = #tpu.pipeline_mode<synchronous>, transform_indices = @transform_2, window_bounds = array<i64: 1, 256>}, {pipeline_mode = #tpu.pipeline_mode<synchronous>, transform_indices = @transform_3, window_bounds = array<i64: 256, 128>}, {pipeline_mode = #tpu.pipeline_mode<synchronous>, transform_indices = @transform_4, window_bounds = array<i64: 1, 128>}, {pipeline_mode = #tpu.pipeline_mode<synchronous>, transform_indices = @transform_5, window_bounds = array<i64: 1, 128>}, {transform_indices = @transform_6, window_bounds = array<i64: 1>}, {transform_indices = @transform_7, window_bounds = array<i64: 1, 1, 16>}]} {
    %c0 = arith.constant 0 : index
    %c0_0 = arith.constant 0 : index
    %0 = vector.load %arg1[%c0, %c0_0] : memref<16x768xf32, #tpu.memory_space<vmem>>, vector<16x768xf32>
    %1 = arith.truncf %0 : vector<16x768xf32> to vector<16x768xbf16>
    %c0_1 = arith.constant 0 : index
    %c0_2 = arith.constant 0 : index
    %2 = vector.load %arg2[%c0_1, %c0_2] : memref<768x256xbf16, #tpu.memory_space<vmem>>, vector<768x256xbf16>
    %cst = arith.constant dense<0.000000e+00> : vector<16x256xf32>
    %3 = tpu.matmul %1, %2, %cst {dimension_numbers = #tpu.dot_dimension_numbers<[1], [0], [0], [1], [0, 0, 1, 1], [], []>} : vector<16x768xbf16>, vector<768x256xbf16>, vector<16x256xf32> -> vector<16x256xf32>
    %c0_3 = arith.constant 0 : index
    %c0_4 = arith.constant 0 : index
    %4 = vector.load %arg3[%c0_3, %c0_4] : memref<1x256xf32, #tpu.memory_space<vmem>>, vector<1x256xf32>
    %5 = vector.broadcast %4 : vector<1x256xf32> to vector<16x256xf32>
    %6 = arith.addf %3, %5 : vector<16x256xf32>
    %cst_5 = arith.constant 0.000000e+00 : f32
    %7 = vector.broadcast %cst_5 : f32 to vector<16x256xf32>
    %8 = arith.cmpf ogt, %6, %7 : vector<16x256xf32>
    %cst_6 = arith.constant 2.000000e-01 : f32
    %9 = vector.broadcast %cst_6 : f32 to vector<16x256xf32>
    %10 = arith.mulf %9, %6 : vector<16x256xf32>
    %11 = arith.select %8, %6, %10 : vector<16x256xi1>, vector<16x256xf32>
    %c0_7 = arith.constant 0 : index
    %c0_8 = arith.constant 0 : index
    %12 = vector.load %arg4[%c0_7, %c0_8] : memref<256x128xf32, #tpu.memory_space<vmem>>, vector<256x128xf32>
    %cst_9 = arith.constant dense<0.000000e+00> : vector<16x128xf32>
    %13 = tpu.matmul %11, %12, %cst_9 {dimension_numbers = #tpu.dot_dimension_numbers<[1], [0], [0], [1], [0, 0, 1, 1], [], []>} : vector<16x256xf32>, vector<256x128xf32>, vector<16x128xf32> -> vector<16x128xf32>
    %c0_10 = arith.constant 0 : index
    %c0_11 = arith.constant 0 : index
    %14 = vector.load %arg5[%c0_10, %c0_11] : memref<1x128xf32, #tpu.memory_space<vmem>>, vector<1x128xf32>
    %15 = vector.broadcast %14 : vector<1x128xf32> to vector<16x128xf32>
    %16 = arith.addf %13, %15 : vector<16x128xf32>
    %cst_12 = arith.constant 0.000000e+00 : f32
    %17 = vector.broadcast %cst_12 : f32 to vector<16x128xf32>
    %18 = arith.cmpf ogt, %16, %17 : vector<16x128xf32>
    %cst_13 = arith.constant 2.000000e-01 : f32
    %19 = vector.broadcast %cst_13 : f32 to vector<16x128xf32>
    %20 = arith.mulf %19, %16 : vector<16x128xf32>
    %21 = arith.select %18, %16, %20 : vector<16x128xi1>, vector<16x128xf32>
    %c0_14 = arith.constant 0 : index
    %c0_15 = arith.constant 0 : index
    %22 = vector.load %arg6[%c0_14, %c0_15] : memref<1x128xf32, #tpu.memory_space<vmem>>, vector<1x128xf32>
    %cst_16 = arith.constant dense<0.000000e+00> : vector<1x16xf32>
    %23 = tpu.matmul %22, %21, %cst_16 {dimension_numbers = #tpu.dot_dimension_numbers<[1], [1], [0], [0], [0, 0, 1, 0], [], []>} : vector<1x128xf32>, vector<16x128xf32>, vector<1x16xf32> -> vector<1x16xf32>
    %c0_17 = arith.constant 0 : index
    %24 = memref.load %arg7[%c0_17] : memref<1xf32, #tpu.memory_space<smem>>
    %25 = vector.broadcast %24 : f32 to vector<1x16xf32>
    %26 = arith.addf %23, %25 : vector<1x16xf32>
    %27 = arith.negf %26 : vector<1x16xf32>
    %28 = math.exp %27 : vector<1x16xf32>
    %cst_18 = arith.constant 1.000000e+00 : f32
    %29 = vector.broadcast %cst_18 : f32 to vector<1x16xf32>
    %30 = arith.addf %29, %28 : vector<1x16xf32>
    %31 = arith.divf %29, %30 : vector<1x16xf32>
    %32 = vector.shape_cast %31 : vector<1x16xf32> to vector<1x1x16xf32>
    %c0_19 = arith.constant 0 : index
    %c0_20 = arith.constant 0 : index
    %c0_21 = arith.constant 0 : index
    %33 = vector.load %arg8[%c0_19, %c0_20, %c0_21] : memref<1x1x16xf32, #tpu.memory_space<vmem>>, vector<1x1x16xf32>
    tpu.vector_store %arg8[%c0_19, %c0_20, %c0_21], %32 {strides = array<i32>} : memref<1x1x16xf32, #tpu.memory_space<vmem>>, vector<1x1x16xf32>,
    return
  }
  func.func @transform_0(%arg0: i32) -> (i32, i32) {
    %c0_i32 = arith.constant 0 : i32
    %c0_i32_0 = arith.constant 0 : i32
    return %arg0, %c0_i32 : i32, i32
  }
  func.func @transform_1(%arg0: i32) -> (i32, i32) {
    %c0_i32 = arith.constant 0 : i32
    %c0_i32_0 = arith.constant 0 : i32
    %c0_i32_1 = arith.constant 0 : i32
    return %c0_i32, %c0_i32_0 : i32, i32
  }
  func.func @transform_2(%arg0: i32) -> (i32, i32) {
    %c0_i32 = arith.constant 0 : i32
    %c0_i32_0 = arith.constant 0 : i32
    %c0_i32_1 = arith.constant 0 : i32
    return %c0_i32, %c0_i32_0 : i32, i32
  }
  func.func @transform_3(%arg0: i32) -> (i32, i32) {
    %c0_i32 = arith.constant 0 : i32
    %c0_i32_0 = arith.constant 0 : i32
    %c0_i32_1 = arith.constant 0 : i32
    return %c0_i32, %c0_i32_0 : i32, i32
  }
  func.func @transform_4(%arg0: i32) -> (i32, i32) {
    %c0_i32 = arith.constant 0 : i32
    %c0_i32_0 = arith.constant 0 : i32
    %c0_i32_1 = arith.constant 0 : i32
    return %c0_i32, %c0_i32_0 : i32, i32
  }
  func.func @transform_5(%arg0: i32) -> (i32, i32) {
    %c0_i32 = arith.constant 0 : i32
    %c0_i32_0 = arith.constant 0 : i32
    %c0_i32_1 = arith.constant 0 : i32
    return %c0_i32, %c0_i32_0 : i32, i32
  }
  func.func @transform_6(%arg0: i32) -> i32 {
    %c0_i32 = arith.constant 0 : i32
    %c0_i32_0 = arith.constant 0 : i32
    return %c0_i32 : i32
  }
  func.func @transform_7(%arg0: i32) -> (i32, i32, i32) {
    %c0_i32 = arith.constant 0 : i32
    %c0_i32_0 = arith.constant 0 : i32
    %c0_i32_1 = arith.constant 0 : i32
    return %arg0, %c0_i32, %c0_i32_0 : i32, i32, i32
  }
}

</mosaic_0001>

<llo_original>
// kernel: discriminator_forward.1
$region0: #{discriminator_forward.1}
  #allocation0 [shape = 'u32[]', space=smem, size = 0x4, offset = 0x4, fixed_abs, tag = 'smem constant byte address 0x4 - core index']
  #allocation1 [shape = 'u32[144,128]{1,0:T(1,128)}', space=vmem, size = 0x12000, scoped, tag = 'internal scratch']
  #allocation2 [shape = 'f32[1]{0:T(128)S(6)}', space=smem, size = 0x200, scoped, tag = 'scoped memory for discriminator_forward.1']
  %s0 = inlined_call_operand.vmem [shape: f32[16,768], index: 0, kind: input, shape index: {}]
  %s1 = inlined_call_operand.vmem [shape: bf16[768,256], index: 1, kind: input, shape index: {}]
  %s2 = inlined_call_operand.vmem [shape: f32[1,256], index: 2, kind: input, shape index: {}]
  %s3 = inlined_call_operand.vmem [shape: f32[256,128], index: 3, kind: input, shape index: {}]
  %s4 = inlined_call_operand.vmem [shape: f32[1,128], index: 4, kind: input, shape index: {}]
  %s5 = inlined_call_operand.vmem [shape: f32[1,128], index: 5, kind: input, shape index: {}]
  %s6 = inlined_call_operand.<no memory space> [shape: f32[1], index: 6, kind: input, shape index: {}]
  %s7 = inlined_call_operand.vmem [shape: f32[1,1,16], index: 7, kind: output, shape index: {}]
  %s8 = sld [smem:[#allocation0]]
  $region38: #{discriminator_forward.1} parent=0
    _
  %s10 = ssub.s32 1, %s8
  %s11 = scalar_select 0, %s10, %s8
  %12 = sst [smem:[#allocation2]] %s6
  // Predicated region
  $region2: #{discriminator_forward.1} parent=0 // pred_check
    _
  $region3: #{discriminator_forward.1} parent=0 // pred_check_branch
    %14 = sbr.rel (0) target = $region5
  $region4: #{discriminator_forward.1} parent=0 // pred_region
    _
  $region5: #{discriminator_forward.1} parent=0 // pred_fallthru
    _
  // Predicated region
  $region6: #{discriminator_forward.1} parent=0 // pred_check
    _
  $region7: #{discriminator_forward.1} parent=0 // pred_check_branch
    %16 = sbr.rel (0) target = $region9
  $region8: #{discriminator_forward.1} parent=0 // pred_region
    _
  $region9: #{discriminator_forward.1} parent=0 // pred_fallthru
    _
  // Predicated region
  $region10: #{discriminator_forward.1} parent=0 // pred_check
    _
  $region11: #{discriminator_forward.1} parent=0 // pred_check_branch
    %18 = sbr.rel (0) target = $region13
  $region12: #{discriminator_forward.1} parent=0 // pred_region
    _
  $region13: #{discriminator_forward.1} parent=0 // pred_fallthru
    _
  // Predicated region
  $region14: #{discriminator_forward.1} parent=0 // pred_check
    _
  $region15: #{discriminator_forward.1} parent=0 // pred_check_branch
    %20 = sbr.rel (0) target = $region17
  $region16: #{discriminator_forward.1} parent=0 // pred_region
    _
  $region17: #{discriminator_forward.1} parent=0 // pred_fallthru
    _
  // Predicated region
  $region18: #{discriminator_forward.1} parent=0 // pred_check
    _
  $region19: #{discriminator_forward.1} parent=0 // pred_check_branch
    %22 = sbr.rel (0) target = $region21
  $region20: #{discriminator_forward.1} parent=0 // pred_region
    _
  $region21: #{discriminator_forward.1} parent=0 // pred_fallthru
    _
  // Predicated region
  $region22: #{discriminator_forward.1} parent=0 // pred_check
    _
  $region23: #{discriminator_forward.1} parent=0 // pred_check_branch
    %24 = sbr.rel (0) target = $region25
  $region24: #{discriminator_forward.1} parent=0 // pred_region
    _
  $region25: #{discriminator_forward.1} parent=0 // pred_fallthru
    _
  // Predicated region
  $region26: #{discriminator_forward.1} parent=0 // pred_check
    _
  $region27: #{discriminator_forward.1} parent=0 // pred_check_branch
    %26 = sbr.rel (0) target = $region29
  $region28: #{discriminator_forward.1} parent=0 // pred_region
    _
  $region29: #{discriminator_forward.1} parent=0 // pred_fallthru
    _
  %v27 = vld [vmem:[%s0] sm:$0xff]
  %v28 = vld [vmem:[%s0 + $0x8] sm:$0xff]
  %v29 = vld [vmem:[%s0 + $0x10] sm:$0xff]
  %v30 = vld [vmem:[%s0 + $0x18] sm:$0xff]
  %v31 = vld [vmem:[%s0 + $0x20] sm:$0xff]
  %v32 = vld [vmem:[%s0 + $0x28] sm:$0xff]
  %v33 = vld [vmem:[%s0 + $0x30] sm:$0xff]
  %v34 = vld [vmem:[%s0 + $0x38] sm:$0xff]
  %v35 = vld [vmem:[%s0 + $0x40] sm:$0xff]
  %v36 = vld [vmem:[%s0 + $0x48] sm:$0xff]
  %v37 = vld [vmem:[%s0 + $0x50] sm:$0xff]
  %v38 = vld [vmem:[%s0 + $0x58] sm:$0xff]
  %v39 = vpack.c.bf16 %v33, %v27
  %v40 = vpack.c.bf16 %v34, %v28
  %v41 = vpack.c.bf16 %v35, %v29
  %v42 = vpack.c.bf16 %v36, %v30
  %v43 = vpack.c.bf16 %v37, %v31
  %v44 = vpack.c.bf16 %v38, %v32
  %v45 = vld [vmem:[%s1] sm:$0xff]
  %v46 = vld [vmem:[%s1 + $0x8] sm:$0xff]
  %v47 = vld [vmem:[%s1 + $0x10] sm:$0xff]
  %v48 = vld [vmem:[%s1 + $0x18] sm:$0xff]
  %v49 = vld [vmem:[%s1 + $0x20] sm:$0xff]
  %v50 = vld [vmem:[%s1 + $0x28] sm:$0xff]
  %v51 = vld [vmem:[%s1 + $0x30] sm:$0xff]
  %v52 = vld [vmem:[%s1 + $0x38] sm:$0xff]
  %v53 = vld [vmem:[%s1 + $0x40] sm:$0xff]
  %v54 = vld [vmem:[%s1 + $0x48] sm:$0xff]
  %v55 = vld [vmem:[%s1 + $0x50] sm:$0xff]
  %v56 = vld [vmem:[%s1 + $0x58] sm:$0xff]
  %v57 = vld [vmem:[%s1 + $0x60] sm:$0xff]
  %v58 = vld [vmem:[%s1 + $0x68] sm:$0xff]
  %v59 = vld [vmem:[%s1 + $0x70] sm:$0xff]
  %v60 = vld [vmem:[%s1 + $0x78] sm:$0xff]
  %v61 = vld [vmem:[%s1 + $0x80] sm:$0xff]
  %v62 = vld [vmem:[%s1 + $0x88] sm:$0xff]
  %v63 = vld [vmem:[%s1 + $0x90] sm:$0xff]
  %v64 = vld [vmem:[%s1 + $0x98] sm:$0xff]
  %v65 = vld [vmem:[%s1 + $0xa0] sm:$0xff]
  %v66 = vld [vmem:[%s1 + $0xa8] sm:$0xff]
  %v67 = vld [vmem:[%s1 + $0xb0] sm:$0xff]
  %v68 = vld [vmem:[%s1 + $0xb8] sm:$0xff]
  %v69 = vld [vmem:[%s1 + $0xc0] sm:$0xff]
  %v70 = vld [vmem:[%s1 + $0xc8] sm:$0xff]
  %v71 = vld [vmem:[%s1 + $0xd0] sm:$0xff]
  %v72 = vld [vmem:[%s1 + $0xd8] sm:$0xff]
  %v73 = vld [vmem:[%s1 + $0xe0] sm:$0xff]
  %v74 = vld [vmem:[%s1 + $0xe8] sm:$0xff]
  %v75 = vld [vmem:[%s1 + $0xf0] sm:$0xff]
  %v76 = vld [vmem:[%s1 + $0xf8] sm:$0xff]
  %v77 = vld [vmem:[%s1 + $0x100] sm:$0xff]
  %v78 = vld [vmem:[%s1 + $0x108] sm:$0xff]
  %v79 = vld [vmem:[%s1 + $0x110] sm:$0xff]
  %v80 = vld [vmem:[%s1 + $0x118] sm:$0xff]
  %v81 = vld [vmem:[%s1 + $0x120] sm:$0xff]
  %v82 = vld [vmem:[%s1 + $0x128] sm:$0xff]
  %v83 = vld [vmem:[%s1 + $0x130] sm:$0xff]
  %v84 = vld [vmem:[%s1 + $0x138] sm:$0xff]
  %v85 = vld [vmem:[%s1 + $0x140] sm:$0xff]
  %v86 = vld [vmem:[%s1 + $0x148] sm:$0xff]
  %v87 = vld [vmem:[%s1 + $0x150] sm:$0xff]
  %v88 = vld [vmem:[%s1 + $0x158] sm:$0xff]
  %v89 = vld [vmem:[%s1 + $0x160] sm:$0xff]
  %v90 = vld [vmem:[%s1 + $0x168] sm:$0xff]
  %v91 = vld [vmem:[%s1 + $0x170] sm:$0xff]
  %v92 = vld [vmem:[%s1 + $0x178] sm:$0xff]
  %v93 = vld [vmem:[%s1 + $0x180] sm:$0xff]
  %v94 = vld [vmem:[%s1 + $0x188] sm:$0xff]
  %v95 = vld [vmem:[%s1 + $0x190] sm:$0xff]
  %v96 = vld [vmem:[%s1 + $0x198] sm:$0xff]
  %v97 = vld [vmem:[%s1 + $0x1a0] sm:$0xff]
  %v98 = vld [vmem:[%s1 + $0x1a8] sm:$0xff]
  %v99 = vld [vmem:[%s1 + $0x1b0] sm:$0xff]
  %v100 = vld [vmem:[%s1 + $0x1b8] sm:$0xff]
  %v101 = vld [vmem:[%s1 + $0x1c0] sm:$0xff]
  %v102 = vld [vmem:[%s1 + $0x1c8] sm:$0xff]
  %v103 = vld [vmem:[%s1 + $0x1d0] sm:$0xff]
  %v104 = vld [vmem:[%s1 + $0x1d8] sm:$0xff]
  %v105 = vld [vmem:[%s1 + $0x1e0] sm:$0xff]
  %v106 = vld [vmem:[%s1 + $0x1e8] sm:$0xff]
  %v107 = vld [vmem:[%s1 + $0x1f0] sm:$0xff]
  %v108 = vld [vmem:[%s1 + $0x1f8] sm:$0xff]
  %v109 = vld [vmem:[%s1 + $0x200] sm:$0xff]
  %v110 = vld [vmem:[%s1 + $0x208] sm:$0xff]
  %v111 = vld [vmem:[%s1 + $0x210] sm:$0xff]
  %v112 = vld [vmem:[%s1 + $0x218] sm:$0xff]
  %v113 = vld [vmem:[%s1 + $0x220] sm:$0xff]
  %v114 = vld [vmem:[%s1 + $0x228] sm:$0xff]
  %v115 = vld [vmem:[%s1 + $0x230] sm:$0xff]
  %v116 = vld [vmem:[%s1 + $0x238] sm:$0xff]
  %v117 = vld [vmem:[%s1 + $0x240] sm:$0xff]
  %v118 = vld [vmem:[%s1 + $0x248] sm:$0xff]
  %v119 = vld [vmem:[%s1 + $0x250] sm:$0xff]
  %v120 = vld [vmem:[%s1 + $0x258] sm:$0xff]
  %v121 = vld [vmem:[%s1 + $0x260] sm:$0xff]
  %v122 = vld [vmem:[%s1 + $0x268] sm:$0xff]
  %v123 = vld [vmem:[%s1 + $0x270] sm:$0xff]
  %v124 = vld [vmem:[%s1 + $0x278] sm:$0xff]
  %v125 = vld [vmem:[%s1 + $0x280] sm:$0xff]
  %v126 = vld [vmem:[%s1 + $0x288] sm:$0xff]
  %v127 = vld [vmem:[%s1 + $0x290] sm:$0xff]
  %v128 = vld [vmem:[%s1 + $0x298] sm:$0xff]
  %v129 = vld [vmem:[%s1 + $0x2a0] sm:$0xff]
  %v130 = vld [vmem:[%s1 + $0x2a8] sm:$0xff]
  %v131 = vld [vmem:[%s1 + $0x2b0] sm:$0xff]
  %v132 = vld [vmem:[%s1 + $0x2b8] sm:$0xff]
  %v133 = vld [vmem:[%s1 + $0x2c0] sm:$0xff]
  %v134 = vld [vmem:[%s1 + $0x2c8] sm:$0xff]
  %v135 = vld [vmem:[%s1 + $0x2d0] sm:$0xff]
  %v136 = vld [vmem:[%s1 + $0x2d8] sm:$0xff]
  %v137 = vld [vmem:[%s1 + $0x2e0] sm:$0xff]
  %v138 = vld [vmem:[%s1 + $0x2e8] sm:$0xff]
  %v139 = vld [vmem:[%s1 + $0x2f0] sm:$0xff]
  %v140 = vld [vmem:[%s1 + $0x2f8] sm:$0xff]
  %v141 = vld [vmem:[%s2] sm:$0x3]
  %v143 = vlaneseq
  %v144 = vshrl.u32 %v143, 7
  %v145 = vsub.s32 0, %v144
  %v146 = vrot.slane %v141, %v145
  %v147 = vlaneseq
  %v148 = vshrl.u32 %v147, 7
  %v149 = vsub.s32 1, %v148
  %v150 = vrot.slane %v141, %v149
  %v249 = vunpack.c.l.b16 %v45
  %v250 = vunpack.c.h.b16 %v45
  %v251 = vunpack.c.l.b16 %v46
  %v252 = vunpack.c.h.b16 %v46
  %v253 = vunpack.c.l.b16 %v47
  %v254 = vunpack.c.h.b16 %v47
  %v255 = vunpack.c.l.b16 %v48
  %v256 = vunpack.c.h.b16 %v48
  %v257 = vunpack.c.l.b16 %v49
  %v258 = vunpack.c.h.b16 %v49
  %v259 = vunpack.c.l.b16 %v50
  %v260 = vunpack.c.h.b16 %v50
  %v261 = vunpack.c.l.b16 %v51
  %v262 = vunpack.c.h.b16 %v51
  %v263 = vunpack.c.l.b16 %v52
  %v264 = vunpack.c.h.b16 %v52
  %v265 = vunpack.c.l.b16 %v53
  %v266 = vunpack.c.h.b16 %v53
  %v267 = vunpack.c.l.b16 %v54
  %v268 = vunpack.c.h.b16 %v54
  %v269 = vunpack.c.l.b16 %v55
  %v270 = vunpack.c.h.b16 %v55
  %v271 = vunpack.c.l.b16 %v56
  %v272 = vunpack.c.h.b16 %v56
  %v273 = vunpack.c.l.b16 %v57
  %v274 = vunpack.c.h.b16 %v57
  %v275 = vunpack.c.l.b16 %v58
  %v276 = vunpack.c.h.b16 %v58
  %v277 = vunpack.c.l.b16 %v59
  %v278 = vunpack.c.h.b16 %v59
  %v279 = vunpack.c.l.b16 %v60
  %v280 = vunpack.c.h.b16 %v60
  %v281 = vunpack.c.l.b16 %v61
  %v282 = vunpack.c.h.b16 %v61
  %v283 = vunpack.c.l.b16 %v62
  %v284 = vunpack.c.h.b16 %v62
  %v285 = vunpack.c.l.b16 %v63
  %v286 = vunpack.c.h.b16 %v63
  %v287 = vunpack.c.l.b16 %v64
  %v288 = vunpack.c.h.b16 %v64
  %v289 = vunpack.c.l.b16 %v65
  %v290 = vunpack.c.h.b16 %v65
  %v291 = vunpack.c.l.b16 %v66
  %v292 = vunpack.c.h.b16 %v66
  %v293 = vunpack.c.l.b16 %v67
  %v294 = vunpack.c.h.b16 %v67
  %v295 = vunpack.c.l.b16 %v68
  %v296 = vunpack.c.h.b16 %v68
  %v297 = vunpack.c.l.b16 %v69
  %v298 = vunpack.c.h.b16 %v69
  %v299 = vunpack.c.l.b16 %v70
  %v300 = vunpack.c.h.b16 %v70
  %v301 = vunpack.c.l.b16 %v71
  %v302 = vunpack.c.h.b16 %v71
  %v303 = vunpack.c.l.b16 %v72
  %v304 = vunpack.c.h.b16 %v72
  %v305 = vunpack.c.l.b16 %v73
  %v306 = vunpack.c.h.b16 %v73
  %v307 = vunpack.c.l.b16 %v74
  %v308 = vunpack.c.h.b16 %v74
  %v309 = vunpack.c.l.b16 %v75
  %v310 = vunpack.c.h.b16 %v75
  %v311 = vunpack.c.l.b16 %v76
  %v312 = vunpack.c.h.b16 %v76
  %v313 = vunpack.c.l.b16 %v77
  %v314 = vunpack.c.h.b16 %v77
  %v315 = vunpack.c.l.b16 %v78
  %v316 = vunpack.c.h.b16 %v78
  %v317 = vunpack.c.l.b16 %v79
  %v318 = vunpack.c.h.b16 %v79
  %v319 = vunpack.c.l.b16 %v80
  %v320 = vunpack.c.h.b16 %v80
  %v321 = vunpack.c.l.b16 %v81
  %v322 = vunpack.c.h.b16 %v81
  %v323 = vunpack.c.l.b16 %v82
  %v324 = vunpack.c.h.b16 %v82
  %v325 = vunpack.c.l.b16 %v83
  %v326 = vunpack.c.h.b16 %v83
  %v327 = vunpack.c.l.b16 %v84
  %v328 = vunpack.c.h.b16 %v84
  %v329 = vunpack.c.l.b16 %v85
  %v330 = vunpack.c.h.b16 %v85
  %v331 = vunpack.c.l.b16 %v86
  %v332 = vunpack.c.h.b16 %v86
  %v333 = vunpack.c.l.b16 %v87
  %v334 = vunpack.c.h.b16 %v87
  %v335 = vunpack.c.l.b16 %v88
  %v336 = vunpack.c.h.b16 %v88
  %v337 = vunpack.c.l.b16 %v89
  %v338 = vunpack.c.h.b16 %v89
  %v339 = vunpack.c.l.b16 %v90
  %v340 = vunpack.c.h.b16 %v90
  %v341 = vunpack.c.l.b16 %v91
  %v342 = vunpack.c.h.b16 %v91
  %v343 = vunpack.c.l.b16 %v92
  %v344 = vunpack.c.h.b16 %v92
  %v345 = vunpack.c.l.b16 %v93
  %v346 = vunpack.c.h.b16 %v93
  %v347 = vunpack.c.l.b16 %v94
  %v348 = vunpack.c.h.b16 %v94
  %v349 = vunpack.c.l.b16 %v95
  %v350 = vunpack.c.h.b16 %v95
  %v351 = vunpack.c.l.b16 %v96
  %v352 = vunpack.c.h.b16 %v96
  %v353 = vunpack.c.l.b16 %v97
  %v354 = vunpack.c.h.b16 %v97
  %v355 = vunpack.c.l.b16 %v98
  %v356 = vunpack.c.h.b16 %v98
  %v357 = vunpack.c.l.b16 %v99
  %v358 = vunpack.c.h.b16 %v99
  %v359 = vunpack.c.l.b16 %v100
  %v360 = vunpack.c.h.b16 %v100
  %v361 = vunpack.c.l.b16 %v101
  %v362 = vunpack.c.h.b16 %v101
  %v363 = vunpack.c.l.b16 %v102
  %v364 = vunpack.c.h.b16 %v102
  %v365 = vunpack.c.l.b16 %v103
  %v366 = vunpack.c.h.b16 %v103
  %v367 = vunpack.c.l.b16 %v104
  %v368 = vunpack.c.h.b16 %v104
  %v369 = vunpack.c.l.b16 %v105
  %v370 = vunpack.c.h.b16 %v105
  %v371 = vunpack.c.l.b16 %v106
  %v372 = vunpack.c.h.b16 %v106
  %v373 = vunpack.c.l.b16 %v107
  %v374 = vunpack.c.h.b16 %v107
  %v375 = vunpack.c.l.b16 %v108
  %v376 = vunpack.c.h.b16 %v108
  %v377 = vunpack.c.l.b16 %v109
  %v378 = vunpack.c.h.b16 %v109
  %v379 = vunpack.c.l.b16 %v110
  %v380 = vunpack.c.h.b16 %v110
  %v381 = vunpack.c.l.b16 %v111
  %v382 = vunpack.c.h.b16 %v111
  %v383 = vunpack.c.l.b16 %v112
  %v384 = vunpack.c.h.b16 %v112
  %v385 = vunpack.c.l.b16 %v113
  %v386 = vunpack.c.h.b16 %v113
  %v387 = vunpack.c.l.b16 %v114
  %v388 = vunpack.c.h.b16 %v114
  %v389 = vunpack.c.l.b16 %v115
  %v390 = vunpack.c.h.b16 %v115
  %v391 = vunpack.c.l.b16 %v116
  %v392 = vunpack.c.h.b16 %v116
  %v393 = vunpack.c.l.b16 %v117
  %v394 = vunpack.c.h.b16 %v117
  %v395 = vunpack.c.l.b16 %v118
  %v396 = vunpack.c.h.b16 %v118
  %v397 = vunpack.c.l.b16 %v119
  %v398 = vunpack.c.h.b16 %v119
  %v399 = vunpack.c.l.b16 %v120
  %v400 = vunpack.c.h.b16 %v120
  %v401 = vunpack.c.l.b16 %v121
  %v402 = vunpack.c.h.b16 %v121
  %v403 = vunpack.c.l.b16 %v122
  %v404 = vunpack.c.h.b16 %v122
  %v405 = vunpack.c.l.b16 %v123
  %v406 = vunpack.c.h.b16 %v123
  %v407 = vunpack.c.l.b16 %v124
  %v408 = vunpack.c.h.b16 %v124
  %v409 = vunpack.c.l.b16 %v125
  %v410 = vunpack.c.h.b16 %v125
  %v411 = vunpack.c.l.b16 %v126
  %v412 = vunpack.c.h.b16 %v126
  %v413 = vunpack.c.l.b16 %v127
  %v414 = vunpack.c.h.b16 %v127
  %v415 = vunpack.c.l.b16 %v128
  %v416 = vunpack.c.h.b16 %v128
  %v417 = vunpack.c.l.b16 %v129
  %v418 = vunpack.c.h.b16 %v129
  %v419 = vunpack.c.l.b16 %v130
  %v420 = vunpack.c.h.b16 %v130
  %v421 = vunpack.c.l.b16 %v131
  %v422 = vunpack.c.h.b16 %v131
  %v423 = vunpack.c.l.b16 %v132
  %v424 = vunpack.c.h.b16 %v132
  %v425 = vunpack.c.l.b16 %v133
  %v426 = vunpack.c.h.b16 %v133
  %v427 = vunpack.c.l.b16 %v134
  %v428 = vunpack.c.h.b16 %v134
  %v429 = vunpack.c.l.b16 %v135
  %v430 = vunpack.c.h.b16 %v135
  %v431 = vunpack.c.l.b16 %v136
  %v432 = vunpack.c.h.b16 %v136
  %v433 = vunpack.c.l.b16 %v137
  %v434 = vunpack.c.h.b16 %v137
  %v435 = vunpack.c.l.b16 %v138
  %v436 = vunpack.c.h.b16 %v138
  %v437 = vunpack.c.l.b16 %v139
  %v438 = vunpack.c.h.b16 %v139
  %v439 = vunpack.c.l.b16 %v140
  %v440 = vunpack.c.h.b16 %v140
  %v441 = vpack.c.b16 %v251, %v249
  %v442 = vpack.c.b16 %v252, %v250
  %v443 = vpack.c.b16 %v255, %v253
  %v444 = vpack.c.b16 %v256, %v254
  %v445 = vpack.c.b16 %v259, %v257
  %v446 = vpack.c.b16 %v260, %v258
  %v447 = vpack.c.b16 %v263, %v261
  %v448 = vpack.c.b16 %v264, %v262
  %v449 = vpack.c.b16 %v267, %v265
  %v450 = vpack.c.b16 %v268, %v266
  %v451 = vpack.c.b16 %v271, %v269
  %v452 = vpack.c.b16 %v272, %v270
  %v453 = vpack.c.b16 %v275, %v273
  %v454 = vpack.c.b16 %v276, %v274
  %v455 = vpack.c.b16 %v279, %v277
  %v456 = vpack.c.b16 %v280, %v278
  %v457 = vpack.c.b16 %v283, %v281
  %v458 = vpack.c.b16 %v284, %v282
  %v459 = vpack.c.b16 %v287, %v285
  %v460 = vpack.c.b16 %v288, %v286
  %v461 = vpack.c.b16 %v291, %v289
  %v462 = vpack.c.b16 %v292, %v290
  %v463 = vpack.c.b16 %v295, %v293
  %v464 = vpack.c.b16 %v296, %v294
  %v465 = vpack.c.b16 %v299, %v297
  %v466 = vpack.c.b16 %v300, %v298
  %v467 = vpack.c.b16 %v303, %v301
  %v468 = vpack.c.b16 %v304, %v302
  %v469 = vpack.c.b16 %v307, %v305
  %v470 = vpack.c.b16 %v308, %v306
  %v471 = vpack.c.b16 %v311, %v309
  %v472 = vpack.c.b16 %v312, %v310
  %v473 = vpack.c.b16 %v315, %v313
  %v474 = vpack.c.b16 %v316, %v314
  %v475 = vpack.c.b16 %v319, %v317
  %v476 = vpack.c.b16 %v320, %v318
  %v477 = vpack.c.b16 %v323, %v321
  %v478 = vpack.c.b16 %v324, %v322
  %v479 = vpack.c.b16 %v327, %v325
  %v480 = vpack.c.b16 %v328, %v326
  %v481 = vpack.c.b16 %v331, %v329
  %v482 = vpack.c.b16 %v332, %v330
  %v483 = vpack.c.b16 %v335, %v333
  %v484 = vpack.c.b16 %v336, %v334
  %v485 = vpack.c.b16 %v339, %v337
  %v486 = vpack.c.b16 %v340, %v338
  %v487 = vpack.c.b16 %v343, %v341
  %v488 = vpack.c.b16 %v344, %v342
  %v489 = vpack.c.b16 %v347, %v345
  %v490 = vpack.c.b16 %v348, %v346
  %v491 = vpack.c.b16 %v351, %v349
  %v492 = vpack.c.b16 %v352, %v350
  %v493 = vpack.c.b16 %v355, %v353
  %v494 = vpack.c.b16 %v356, %v354
  %v495 = vpack.c.b16 %v359, %v357
  %v496 = vpack.c.b16 %v360, %v358
  %v497 = vpack.c.b16 %v363, %v361
  %v498 = vpack.c.b16 %v364, %v362
  %v499 = vpack.c.b16 %v367, %v365
  %v500 = vpack.c.b16 %v368, %v366
  %v501 = vpack.c.b16 %v371, %v369
  %v502 = vpack.c.b16 %v372, %v370
  %v503 = vpack.c.b16 %v375, %v373
  %v504 = vpack.c.b16 %v376, %v374
  %v505 = vpack.c.b16 %v379, %v377
  %v506 = vpack.c.b16 %v380, %v378
  %v507 = vpack.c.b16 %v383, %v381
  %v508 = vpack.c.b16 %v384, %v382
  %v509 = vpack.c.b16 %v387, %v385
  %v510 = vpack.c.b16 %v388, %v386
  %v511 = vpack.c.b16 %v391, %v389
  %v512 = vpack.c.b16 %v392, %v390
  %v513 = vpack.c.b16 %v395, %v393
  %v514 = vpack.c.b16 %v396, %v394
  %v515 = vpack.c.b16 %v399, %v397
  %v516 = vpack.c.b16 %v400, %v398
  %v517 = vpack.c.b16 %v403, %v401
  %v518 = vpack.c.b16 %v404, %v402
  %v519 = vpack.c.b16 %v407, %v405
  %v520 = vpack.c.b16 %v408, %v406
  %v521 = vpack.c.b16 %v411, %v409
  %v522 = vpack.c.b16 %v412, %v410
  %v523 = vpack.c.b16 %v415, %v413
  %v524 = vpack.c.b16 %v416, %v414
  %v525 = vpack.c.b16 %v419, %v417
  %v526 = vpack.c.b16 %v420, %v418
  %v527 = vpack.c.b16 %v423, %v421
  %v528 = vpack.c.b16 %v424, %v422
  %v529 = vpack.c.b16 %v427, %v425
  %v530 = vpack.c.b16 %v428, %v426
  %v531 = vpack.c.b16 %v431, %v429
  %v532 = vpack.c.b16 %v432, %v430
  %v533 = vpack.c.b16 %v435, %v433
  %v534 = vpack.c.b16 %v436, %v434
  %v535 = vpack.c.b16 %v439, %v437
  %v536 = vpack.c.b16 %v440, %v438
  %633 = vmatprep.subr.bf16.mxu0 %v442
  %634 = vmatpush1.bf16.msra.mxu0 %v441
  %635 = vmatprep.subr.bf16.mxu0 %v444
  %636 = vmatpush1.bf16.msra.mxu0 %v443
  %637 = vmatprep.subr.bf16.mxu0 %v446
  %638 = vmatpush1.bf16.msra.mxu0 %v445
  %639 = vmatprep.subr.bf16.mxu0 %v448
  %640 = vmatpush1.bf16.msra.mxu0 %v447
  %641 = vmatprep.subr.bf16.mxu0 %v450
  %642 = vmatpush1.bf16.msra.mxu0 %v449
  %643 = vmatprep.subr.bf16.mxu0 %v452
  %644 = vmatpush1.bf16.msra.mxu0 %v451
  %645 = vmatprep.subr.bf16.mxu0 %v454
  %646 = vmatpush1.bf16.msra.mxu0 %v453
  %647 = vmatprep.subr.bf16.mxu0 %v456
  %648 = vmatpush1.bf16.msra.mxu0 %v455
  %649 = vmatprep.subr.bf16.mxu0 %v458
  %650 = vmatpush1.bf16.msra.mxu0 %v457
  %651 = vmatprep.subr.bf16.mxu0 %v460
  %652 = vmatpush1.bf16.msra.mxu0 %v459
  %653 = vmatprep.subr.bf16.mxu0 %v462
  %654 = vmatpush1.bf16.msra.mxu0 %v461
  %655 = vmatprep.subr.bf16.mxu0 %v464
  %656 = vmatpush1.bf16.msra.mxu0 %v463
  %657 = vmatprep.subr.bf16.mxu0 %v466
  %658 = vmatpush1.bf16.msra.mxu0 %v465
  %659 = vmatprep.subr.bf16.mxu0 %v468
  %660 = vmatpush1.bf16.msra.mxu0 %v467
  %661 = vmatprep.subr.bf16.mxu0 %v470
  %662 = vmatpush1.bf16.msra.mxu0 %v469
  %663 = vmatprep.subr.bf16.mxu0 %v472
  %664 = vmatpush1.bf16.msra.mxu0 %v471
  %665 = vmatprep.mubr.bf16.mxu0 %v40
  %666 = vmatmul.mubr.bf16.gmra.mrb[0].mxu0 %v39
  %v667 = vpop.f32.mrb[0].mxu0
  %v668 = vadd.f32 %v146, %v667
  %v669 = vpop.f32.mrb[0].mxu0
  %v670 = vadd.f32 %v150, %v669
  %v671 = vpop.f32.mrb[0].mxu0
  %v672 = vadd.f32 %v146, %v671
  %v673 = vpop.f32.mrb[0].mxu0
  %v674 = vadd.f32 %v150, %v673
  %675 = vdwg.mxu0
  %676 = vmatprep.subr.bf16.mxu0 %v474
  %677 = vmatpush1.bf16.msra.mxu0 %v473
  %678 = vmatprep.subr.bf16.mxu0 %v476
  %679 = vmatpush1.bf16.msra.mxu0 %v475
  %680 = vmatprep.subr.bf16.mxu0 %v478
  %681 = vmatpush1.bf16.msra.mxu0 %v477
  %682 = vmatprep.subr.bf16.mxu0 %v480
  %683 = vmatpush1.bf16.msra.mxu0 %v479
  %684 = vmatprep.subr.bf16.mxu0 %v482
  %685 = vmatpush1.bf16.msra.mxu0 %v481
  %686 = vmatprep.subr.bf16.mxu0 %v484
  %687 = vmatpush1.bf16.msra.mxu0 %v483
  %688 = vmatprep.subr.bf16.mxu0 %v486
  %689 = vmatpush1.bf16.msra.mxu0 %v485
  %690 = vmatprep.subr.bf16.mxu0 %v488
  %691 = vmatpush1.bf16.msra.mxu0 %v487
  %692 = vmatprep.subr.bf16.mxu0 %v490
  %693 = vmatpush1.bf16.msra.mxu0 %v489
  %694 = vmatprep.subr.bf16.mxu0 %v492
  %695 = vmatpush1.bf16.msra.mxu0 %v491
  %696 = vmatprep.subr.bf16.mxu0 %v494
  %697 = vmatpush1.bf16.msra.mxu0 %v493
  %698 = vmatprep.subr.bf16.mxu0 %v496
  %699 = vmatpush1.bf16.msra.mxu0 %v495
  %700 = vmatprep.subr.bf16.mxu0 %v498
  %701 = vmatpush1.bf16.msra.mxu0 %v497
  %702 = vmatprep.subr.bf16.mxu0 %v500
  %703 = vmatpush1.bf16.msra.mxu0 %v499
  %704 = vmatprep.subr.bf16.mxu0 %v502
  %705 = vmatpush1.bf16.msra.mxu0 %v501
  %706 = vmatprep.subr.bf16.mxu0 %v504
  %707 = vmatpush1.bf16.msra.mxu0 %v503
  %708 = vmatprep.mubr.bf16.mxu0 %v42
  %709 = vmatmul.mubr.bf16.gmra.mrb[0].mxu0 %v41
  %v710 = vpop.f32.mrb[0].mxu0
  %v711 = vadd.f32 %v668, %v710
  %v712 = vpop.f32.mrb[0].mxu0
  %v713 = vadd.f32 %v670, %v712
  %v714 = vpop.f32.mrb[0].mxu0
  %v715 = vadd.f32 %v672, %v714
  %v716 = vpop.f32.mrb[0].mxu0
  %v717 = vadd.f32 %v674, %v716
  %718 = vdwg.mxu0
  %719 = vmatprep.subr.bf16.mxu0 %v506
  %720 = vmatpush1.bf16.msra.mxu0 %v505
  %721 = vmatprep.subr.bf16.mxu0 %v508
  %722 = vmatpush1.bf16.msra.mxu0 %v507
  %723 = vmatprep.subr.bf16.mxu0 %v510
  %724 = vmatpush1.bf16.msra.mxu0 %v509
  %725 = vmatprep.subr.bf16.mxu0 %v512
  %726 = vmatpush1.bf16.msra.mxu0 %v511
  %727 = vmatprep.subr.bf16.mxu0 %v514
  %728 = vmatpush1.bf16.msra.mxu0 %v513
  %729 = vmatprep.subr.bf16.mxu0 %v516
  %730 = vmatpush1.bf16.msra.mxu0 %v515
  %731 = vmatprep.subr.bf16.mxu0 %v518
  %732 = vmatpush1.bf16.msra.mxu0 %v517
  %733 = vmatprep.subr.bf16.mxu0 %v520
  %734 = vmatpush1.bf16.msra.mxu0 %v519
  %735 = vmatprep.subr.bf16.mxu0 %v522
  %736 = vmatpush1.bf16.msra.mxu0 %v521
  %737 = vmatprep.subr.bf16.mxu0 %v524
  %738 = vmatpush1.bf16.msra.mxu0 %v523
  %739 = vmatprep.subr.bf16.mxu0 %v526
  %740 = vmatpush1.bf16.msra.mxu0 %v525
  %741 = vmatprep.subr.bf16.mxu0 %v528
  %742 = vmatpush1.bf16.msra.mxu0 %v527
  %743 = vmatprep.subr.bf16.mxu0 %v530
  %744 = vmatpush1.bf16.msra.mxu0 %v529
  %745 = vmatprep.subr.bf16.mxu0 %v532
  %746 = vmatpush1.bf16.msra.mxu0 %v531
  %747 = vmatprep.subr.bf16.mxu0 %v534
  %748 = vmatpush1.bf16.msra.mxu0 %v533
  %749 = vmatprep.subr.bf16.mxu0 %v536
  %750 = vmatpush1.bf16.msra.mxu0 %v535
  %751 = vmatprep.mubr.bf16.mxu0 %v44
  %752 = vmatmul.mubr.bf16.gmra.mrb[0].mxu0 %v43
  %v753 = vpop.f32.mrb[0].mxu0
  %v754 = vadd.f32 %v711, %v753
  %v755 = vpop.f32.mrb[0].mxu0
  %v756 = vadd.f32 %v713, %v755
  %v757 = vpop.f32.mrb[0].mxu0
  %v758 = vadd.f32 %v715, %v757
  %v759 = vpop.f32.mrb[0].mxu0
  %v760 = vadd.f32 %v717, %v759
  %761 = vdwg.mxu0
  %vm762 = vcmp.gt.f32.partialorder %v754, 0.0
  %vm763 = vcmp.gt.f32.partialorder %v756, 0.0
  %vm764 = vcmp.gt.f32.partialorder %v758, 0.0
  %vm765 = vcmp.gt.f32.partialorder %v760, 0.0
  %v766 = vmul.f32 %v754, 0.2
  %v767 = vmul.f32 %v756, 0.2
  %v768 = vmul.f32 %v758, 0.2
  %v769 = vmul.f32 %v760, 0.2
  %v770 = vsel %vm762, %v754, %v766
  %v771 = vsel %vm763, %v756, %v767
  %v772 = vsel %vm764, %v758, %v768
  %v773 = vsel %vm765, %v760, %v769
  %v774 = vld [vmem:[%s3] sm:$0xff]
  %v775 = vld [vmem:[%s3 + $0x8] sm:$0xff]
  %v776 = vld [vmem:[%s3 + $0x10] sm:$0xff]
  %v777 = vld [vmem:[%s3 + $0x18] sm:$0xff]
  %v778 = vld [vmem:[%s3 + $0x20] sm:$0xff]
  %v779 = vld [vmem:[%s3 + $0x28] sm:$0xff]
  %v780 = vld [vmem:[%s3 + $0x30] sm:$0xff]
  %v781 = vld [vmem:[%s3 + $0x38] sm:$0xff]
  %v782 = vld [vmem:[%s3 + $0x40] sm:$0xff]
  %v783 = vld [vmem:[%s3 + $0x48] sm:$0xff]
  %v784 = vld [vmem:[%s3 + $0x50] sm:$0xff]
  %v785 = vld [vmem:[%s3 + $0x58] sm:$0xff]
  %v786 = vld [vmem:[%s3 + $0x60] sm:$0xff]
  %v787 = vld [vmem:[%s3 + $0x68] sm:$0xff]
  %v788 = vld [vmem:[%s3 + $0x70] sm:$0xff]
  %v789 = vld [vmem:[%s3 + $0x78] sm:$0xff]
  %v790 = vld [vmem:[%s3 + $0x80] sm:$0xff]
  %v791 = vld [vmem:[%s3 + $0x88] sm:$0xff]
  %v792 = vld [vmem:[%s3 + $0x90] sm:$0xff]
  %v793 = vld [vmem:[%s3 + $0x98] sm:$0xff]
  %v794 = vld [vmem:[%s3 + $0xa0] sm:$0xff]
  %v795 = vld [vmem:[%s3 + $0xa8] sm:$0xff]
  %v796 = vld [vmem:[%s3 + $0xb0] sm:$0xff]
  %v797 = vld [vmem:[%s3 + $0xb8] sm:$0xff]
  %v798 = vld [vmem:[%s3 + $0xc0] sm:$0xff]
  %v799 = vld [vmem:[%s3 + $0xc8] sm:$0xff]
  %v800 = vld [vmem:[%s3 + $0xd0] sm:$0xff]
  %v801 = vld [vmem:[%s3 + $0xd8] sm:$0xff]
  %v802 = vld [vmem:[%s3 + $0xe0] sm:$0xff]
  %v803 = vld [vmem:[%s3 + $0xe8] sm:$0xff]
  %v804 = vld [vmem:[%s3 + $0xf0] sm:$0xff]
  %v805 = vld [vmem:[%s3 + $0xf8] sm:$0xff]
  %v806 = vld [vmem:[%s4] sm:$0x1]
  %v808 = vlaneseq
  %v809 = vshrl.u32 %v808, 7
  %v810 = vsub.s32 0, %v809
  %v811 = vrot.slane %v806, %v810
  %813 = vmatprep.subr.mxu0 0.0
  %814 = vmatpush1.msra.mxu0 %v774
  %815 = vmatprep.subr.mxu0 0.0
  %816 = vmatpush1.msra.mxu0 %v775
  %817 = vmatprep.subr.mxu0 0.0
  %818 = vmatpush1.msra.mxu0 %v776
  %819 = vmatprep.subr.mxu0 0.0
  %820 = vmatpush1.msra.mxu0 %v777
  %821 = vmatprep.subr.mxu0 0.0
  %822 = vmatpush1.msra.mxu0 %v778
  %823 = vmatprep.subr.mxu0 0.0
  %824 = vmatpush1.msra.mxu0 %v779
  %825 = vmatprep.subr.mxu0 0.0
  %826 = vmatpush1.msra.mxu0 %v780
  %827 = vmatprep.subr.mxu0 0.0
  %828 = vmatpush1.msra.mxu0 %v781
  %829 = vmatprep.subr.mxu0 0.0
  %830 = vmatpush1.msra.mxu0 %v782
  %831 = vmatprep.subr.mxu0 0.0
  %832 = vmatpush1.msra.mxu0 %v783
  %833 = vmatprep.subr.mxu0 0.0
  %834 = vmatpush1.msra.mxu0 %v784
  %835 = vmatprep.subr.mxu0 0.0
  %836 = vmatpush1.msra.mxu0 %v785
  %837 = vmatprep.subr.mxu0 0.0
  %838 = vmatpush1.msra.mxu0 %v786
  %839 = vmatprep.subr.mxu0 0.0
  %840 = vmatpush1.msra.mxu0 %v787
  %841 = vmatprep.subr.mxu0 0.0
  %842 = vmatpush1.msra.mxu0 %v788
  %843 = vmatprep.subr.mxu0 0.0
  %844 = vmatpush1.msra.mxu0 %v789
  %845 = vmatprep.subr.mxu0 0.0
  %846 = vmatpush1.msra.mxu0 %v790
  %847 = vmatprep.subr.mxu0 0.0
  %848 = vmatpush1.msra.mxu0 %v791
  %849 = vmatprep.subr.mxu0 0.0
  %850 = vmatpush1.msra.mxu0 %v792
  %851 = vmatprep.subr.mxu0 0.0
  %852 = vmatpush1.msra.mxu0 %v793
  %853 = vmatprep.subr.mxu0 0.0
  %854 = vmatpush1.msra.mxu0 %v794
  %855 = vmatprep.subr.mxu0 0.0
  %856 = vmatpush1.msra.mxu0 %v795
  %857 = vmatprep.subr.mxu0 0.0
  %858 = vmatpush1.msra.mxu0 %v796
  %859 = vmatprep.subr.mxu0 0.0
  %860 = vmatpush1.msra.mxu0 %v797
  %861 = vmatprep.subr.mxu0 0.0
  %862 = vmatpush1.msra.mxu0 %v798
  %863 = vmatprep.subr.mxu0 0.0
  %864 = vmatpush1.msra.mxu0 %v799
  %865 = vmatprep.subr.mxu0 0.0
  %866 = vmatpush1.msra.mxu0 %v800
  %867 = vmatprep.subr.mxu0 0.0
  %868 = vmatpush1.msra.mxu0 %v801
  %869 = vmatprep.subr.mxu0 0.0
  %870 = vmatpush1.msra.mxu0 %v802
  %871 = vmatprep.subr.mxu0 0.0
  %872 = vmatpush1.msra.mxu0 %v803
  %873 = vmatprep.subr.mxu0 0.0
  %874 = vmatpush1.msra.mxu0 %v804
  %875 = vmatprep.subr.mxu0 0.0
  %876 = vmatpush1.msra.mxu0 %v805
  %877 = vmatprep.mubr.f32.mxu0 %v771
  %878 = vmatmul.mubr.f32.gmra.mrb[0].mxu0 %v770
  %v879 = vpop.f32.mrb[0].mxu0
  %v880 = vadd.f32 %v811, %v879
  %v881 = vpop.f32.mrb[0].mxu0
  %882 = vmatprep.mubr.f32.mxu0 %v773
  %883 = vmatmul.mubr.f32.gmra.mrb[0].mxu0 %v772
  %v884 = vpop.f32.mrb[0].mxu0
  %v885 = vadd.f32 %v811, %v884
  %v886 = vpop.f32.mrb[0].mxu0
  %887 = vdwg.mxu0
  %vm888 = vcmp.gt.f32.partialorder %v880, 0.0
  %vm889 = vcmp.gt.f32.partialorder %v885, 0.0
  %v890 = vmul.f32 %v880, 0.2
  %v891 = vmul.f32 %v885, 0.2
  %v892 = vsel %vm888, %v880, %v890
  %v893 = vsel %vm889, %v885, %v891
  %v894 = vld [vmem:[%s5] sm:$0x1]
  %s895 = sld [smem:[#allocation2]]
  %v896 = vstv %s895
  %897 = vmatprep.subr.mxu0 0.0
  %898 = vmatpush1.xpose.msra.mxu0 %v892
  %899 = vmatprep.subr.mxu0 0.0
  %900 = vmatpush1.xpose.msra.mxu0 %v893
  %901 = vmatprep.subr.mxu0 0.0
  %902 = vmatpush1.xpose.msra.mxu0 0.0
  %903 = vmatprep.subr.mxu0 0.0
  %904 = vmatpush1.xpose.msra.mxu0 0.0
  %905 = vmatprep.subr.mxu0 0.0
  %906 = vmatpush1.xpose.msra.mxu0 0.0
  %907 = vmatprep.subr.mxu0 0.0
  %908 = vmatpush1.xpose.msra.mxu0 0.0
  %909 = vmatprep.subr.mxu0 0.0
  %910 = vmatpush1.xpose.msra.mxu0 0.0
  %911 = vmatprep.subr.mxu0 0.0
  %912 = vmatpush1.xpose.msra.mxu0 0.0
  %913 = vmatprep.subr.mxu0 0.0
  %914 = vmatpush1.xpose.msra.mxu0 0.0
  %915 = vmatprep.subr.mxu0 0.0
  %916 = vmatpush1.xpose.msra.mxu0 0.0
  %917 = vmatprep.subr.mxu0 0.0
  %918 = vmatpush1.xpose.msra.mxu0 0.0
  %919 = vmatprep.subr.mxu0 0.0
  %920 = vmatpush1.xpose.msra.mxu0 0.0
  %921 = vmatprep.subr.mxu0 0.0
  %922 = vmatpush1.xpose.msra.mxu0 0.0
  %923 = vmatprep.subr.mxu0 0.0
  %924 = vmatpush1.xpose.msra.mxu0 0.0
  %925 = vmatprep.subr.mxu0 0.0
  %926 = vmatpush1.xpose.msra.mxu0 0.0
  %927 = vmatprep.subr.mxu0 0.0
  %928 = vmatpush1.xpose.msra.mxu0 0.0
  %929 = vmatprep.subr.mxu0 0.0
  %930 = vmatpush1.xpose.msra.mxu0 0.0
  %931 = vmatprep.subr.mxu0 0.0
  %932 = vmatpush1.xpose.msra.mxu0 0.0
  %933 = vmatprep.subr.mxu0 0.0
  %934 = vmatpush1.xpose.msra.mxu0 0.0
  %935 = vmatprep.subr.mxu0 0.0
  %936 = vmatpush1.xpose.msra.mxu0 0.0
  %937 = vmatprep.subr.mxu0 0.0
  %938 = vmatpush1.xpose.msra.mxu0 0.0
  %939 = vmatprep.subr.mxu0 0.0
  %940 = vmatpush1.xpose.msra.mxu0 0.0
  %941 = vmatprep.subr.mxu0 0.0
  %942 = vmatpush1.xpose.msra.mxu0 0.0
  %943 = vmatprep.subr.mxu0 0.0
  %944 = vmatpush1.xpose.msra.mxu0 0.0
  %945 = vmatprep.subr.mxu0 0.0
  %946 = vmatpush1.xpose.msra.mxu0 0.0
  %947 = vmatprep.subr.mxu0 0.0
  %948 = vmatpush1.xpose.msra.mxu0 0.0
  %949 = vmatprep.subr.mxu0 0.0
  %950 = vmatpush1.xpose.msra.mxu0 0.0
  %951 = vmatprep.subr.mxu0 0.0
  %952 = vmatpush1.xpose.msra.mxu0 0.0
  %953 = vmatprep.subr.mxu0 0.0
  %954 = vmatpush1.xpose.msra.mxu0 0.0
  %955 = vmatprep.subr.mxu0 0.0
  %956 = vmatpush1.xpose.msra.mxu0 0.0
  %957 = vmatprep.subr.mxu0 0.0
  %958 = vmatpush1.xpose.msra.mxu0 0.0
  %959 = vmatprep.subr.mxu0 0.0
  %960 = vmatpush1.xpose.msra.mxu0 0.0
  %961 = vmatprep.mubr.f32.mxu0 0.0
  %962 = vmatmul.mubr.f32.gmra.mrb[0].mxu0 %v894
  %v963 = vpop.f32.mrb[0].mxu0
  %v964 = vadd.f32 %v896, %v963
  %v965 = vpop.f32.mrb[0].mxu0
  %966 = vdwg.mxu0
  %v967 = vxor.u32 %v964, 2147483648
  %v968 = vmul.f32 %v967, 1.442695
  %v969 = vpow.pop %v968
  %v970 = vadd.f32 %v969, 1.0
  %v971 = vrcp.pop %v970
  %v972 = vmul.f32 1.0, %v971
  %vm973 = vcmask 122880
  %974 = vst.msk [vmem:[%s7] sm:$0x1] %vm973, %v972
  // Predicated region
  $region30: #{discriminator_forward.1} parent=0 // pred_check
    _
  $region31: #{discriminator_forward.1} parent=0 // pred_check_branch
    %976 = sbr.rel (0) target = $region33
  $region32: #{discriminator_forward.1} parent=0 // pred_region
    _
  $region33: #{discriminator_forward.1} parent=0 // pred_fallthru
    _
  // Predicated region
  $region34: #{discriminator_forward.1} parent=0 // pred_check
    _
  $region35: #{discriminator_forward.1} parent=0 // pred_check_branch
    %978 = sbr.rel (0) target = $region37
  $region36: #{discriminator_forward.1} parent=0 // pred_region
    _
  $region37: #{discriminator_forward.1} parent=0 // pred_fallthru
    _

</llo_original>
